<compile_context>
chip_gen: v6e
topology: v6e:2x2x1
jax: 0.10.0
libtpu: 0.0.40
codegen_flags: <defaults>
</compile_context>

<pallas_src>
import functools
import math

import jax
import jax.numpy as jnp
from jax.experimental import pallas as pl
from jax.experimental.pallas import tpu as pltpu

ENCODER_OUTPUT_CHANNELS = 8

K1 = 28    # 27 conv1 taps + 1 bias-selector row
K2 = 145   # 144 conv2 taps + 1 bias-selector row


def _round_up(x, m):
    return (x + m - 1) // m * m


def _choose_group_size(n, bytes_per_image, target_bytes=2 << 20):
    """Largest divisor of n whose cols block fits the per-step budget; keep >=2 grid steps
    when n >= 2 so v7x's second TensorCore gets work."""
    max_blk = max(1, target_bytes // max(bytes_per_image, 1))
    best = 1
    for d in range(1, n + 1):
        if n % d == 0 and d <= max_blk and (n // d >= 2 or n == 1):
            best = d
    return best


def _fused_encoder_kernel(cols_ref, w1_ref, w2_ref, o_ref, *, wq, mq, m2, blk):
    """Fused conv1(+ReLU) -> conv2(+sigmoid) for one group of `blk` images.

    cols_ref: (1, K1, 4*mq) bf16 -- conv1 im2col, transposed layout (K on sublanes, output
              positions on lanes).  Lanes are grouped into the 4 parity classes of the
              zero-padded conv1-output grid (class offsets q*mq are 128-aligned); inside a
              class they are ordered (position, image), so every layer-2 tap is ONE
              contiguous lane slice covering all output rows and all images of the group.
              Padding positions are all-zero columns (including the bias-selector row).
    w1_ref:   (16, K1) bf16   [W1 | b1]
    w2_ref:   (8,  K2) bf16   [W2 | b2]
    o_ref:    (1, 8, m2) f32  lanes = (row, padded-col, image); the one garbage column per
              wq-block and the lane padding are dropped by the host wrapper.
    """
    w1 = w1_ref[...]
    w2 = w2_ref[...]

    # ---- layer 1: ONE transposed GEMM over all 4 parity classes and all images ----------
    # h1[c1, q*mq + (i*wq+j)*blk + b] = relu(conv1 + b1) of image b at padded-grid coords
    # (2i+pr, 2j+pc), q = pr*2+pc; exact 0 at padding positions.
    h1 = jnp.dot(w1, cols_ref[0], preferred_element_type=jnp.float32)      # (16, 4*mq)
    h1 = jnp.maximum(h1, 0.0).astype(jnp.bfloat16)

    # ---- layer 2: ONE GEMM; each of the 9 taps is a single contiguous lane slice ---------
    chunks = []
    for kh in range(3):
        for kw in range(3):
            q = (kh % 2) * 2 + (kw % 2)
            start = q * mq + ((kh // 2) * wq + (kw // 2)) * blk            # static offset
            chunks.append(h1[:, start:start + m2])                         # (16, m2)
    chunks.append(jnp.ones((1, m2), jnp.bfloat16))                         # bias-selector row
    cols2 = jnp.concatenate(chunks, axis=0)                                # (K2, m2)
    acc2 = jnp.dot(w2, cols2, preferred_element_type=jnp.float32)          # (8, m2)
    o_ref[0] = jax.nn.sigmoid(acc2).astype(o_ref.dtype)                    # lane-dense store


def _build_layer1_operand(x_nchw, blk):
    """conv1 im2col in transposed (K, M) layout, grouped into the 4 parity classes of the
    zero-padded conv1-output grid, with `blk` images interleaved lane-minor (position-major,
    image-minor).  Returns (cols (G, K1, 4*mq) bf16, geometry dict)."""
    n, c, h, w = x_nchw.shape
    assert c == 3 and h % 4 == 0 and w % 4 == 0, (c, h, w)
    # TODO(synk): odd H/W (PyTorch defines outputs via floor) would need extra edge handling.
    ho1, wo1 = h // 2, w // 2
    ho2, wo2 = h // 4, w // 4
    hq, wq = ho1 // 2 + 1, wo1 // 2 + 1          # parity-class extent of the padded grid
    g = n // blk
    m2 = _round_up(ho2 * wq * blk, 128)          # lane width of the layer-2 GEMM / output
    mq = _round_up((wq + 1) * blk + m2, 128)     # per-class lane extent (128-aligned offsets)

    xpad = jnp.pad(x_nchw, ((0, 0), (0, 0), (1, 1), (1, 1)))
    taps = [xpad[:, :, kh:kh + 2 * ho1:2, kw:kw + 2 * wo1:2]
            for kh in range(3) for kw in range(3)]                         # each (N,3,ho1,wo1)
    cols = jnp.concatenate(taps, axis=1)                                   # K order = (kh,kw,ci)
    cols = jnp.concatenate([cols, jnp.ones((n, 1, ho1, wo1), cols.dtype)], axis=1)  # bias row
    colspad = jnp.pad(cols, ((0, 0), (0, 0), (1, 1), (1, 1)))              # zero ring = conv2 pad
    classes = jnp.stack([colspad[:, :, pr::2, pc::2] for pr in (0, 1) for pc in (0, 1)],
                        axis=1)                                            # (N, 4, K1, hq, wq)
    classes = classes.reshape(g, blk, 4, K1, hq * wq)
    classes = jnp.transpose(classes, (0, 2, 3, 4, 1))                      # (G,4,K1,hq*wq,blk)
    classes = classes.reshape(g, 4, K1, hq * wq * blk)
    classes = jnp.pad(classes, ((0, 0), (0, 0), (0, 0), (0, mq - hq * wq * blk)))
    cols_op = jnp.transpose(classes, (0, 2, 1, 3)).reshape(g, K1, 4 * mq)
    geom = dict(ho2=ho2, wo2=wo2, wq=wq, mq=mq, m2=m2, blk=blk, g=g)
    return cols_op.astype(jnp.bfloat16), geom


class ColorEncoderPallas:
    """Deterministic re-implementation of the PyTorch ColorEncoder forward pass."""

    def __init__(self, key):
        k1, k2, k3, k4 = jax.random.split(key, 4)
        # PyTorch default Conv2d init: U(-1/sqrt(fan_in), 1/sqrt(fan_in))
        fan1 = 3 * 3 * 3
        b1 = 1.0 / math.sqrt(fan1)
        self.w1 = jax.random.uniform(k1, (16, 3, 3, 3), jnp.float32, -b1, b1)
        self.b1 = jax.random.uniform(k2, (16,), jnp.float32, -b1, b1)
        fan2 = 16 * 3 * 3
        b2 = 1.0 / math.sqrt(fan2)
        self.w2 = jax.random.uniform(k3, (ENCODER_OUTPUT_CHANNELS, 16, 3, 3), jnp.float32, -b2, b2)
        self.b2 = jax.random.uniform(k4, (ENCODER_OUTPUT_CHANNELS,), jnp.float32, -b2, b2)

        # Augmented bf16 weight matrices [W | b], K order = (kh, kw, cin); no dead zero rows.
        w1m = jnp.transpose(self.w1, (0, 2, 3, 1)).reshape(16, 27)
        self.w1aug = jnp.concatenate([w1m, self.b1[:, None]], axis=1).astype(jnp.bfloat16)  # (16,28)
        w2m = jnp.transpose(self.w2, (0, 2, 3, 1)).reshape(ENCODER_OUTPUT_CHANNELS, 144)
        self.w2aug = jnp.concatenate([w2m, self.b2[:, None]], axis=1).astype(jnp.bfloat16)  # (8,145)

    def __call__(self, x_nchw):
        n, _, h, w = x_nchw.shape
        hq, wq = h // 4 + 1, w // 4 + 1
        per_image_bytes = K1 * 4 * _round_up(hq * wq, 128) * 2
        blk = _choose_group_size(n, per_image_bytes)

        cols, geom = _build_layer1_operand(x_nchw, blk)
        ho2, wo2 = geom["ho2"], geom["wo2"]
        mq, m2, g = geom["mq"], geom["m2"], geom["g"]

        kernel = functools.partial(_fused_encoder_kernel, wq=geom["wq"], mq=mq, m2=m2, blk=blk)

        # Per-step VMEM budget: cols (double-buffered) + h1 + cols2 + f32 out (double-buffered).
        est = (2 * K1 * 4 * mq * 2 + 16 * 4 * mq * 2 + (K2 + 7) * m2 * 2
               + 2 * ENCODER_OUTPUT_CHANNELS * m2 * 4 + (1 << 20))
        vmem_limit = int(min(max(est, 32 << 20), 64 << 20))
        # TODO(synk): very large images need a spatial (output-row) grid axis with halos
        # instead of one whole image group per grid step (v7x only has 64 MiB VMEM).

        out = pl.pallas_call(
            kernel,
            out_shape=jax.ShapeDtypeStruct((g, ENCODER_OUTPUT_CHANNELS, m2), jnp.float32),
            grid=(g,),
            in_specs=[
                pl.BlockSpec((1, K1, 4 * mq), lambda i: (i, 0, 0)),
                pl.BlockSpec((16, K1), lambda i: (0, 0)),                        # resident weights
                pl.BlockSpec((ENCODER_OUTPUT_CHANNELS, K2), lambda i: (0, 0)),   # resident weights
            ],
            out_specs=pl.BlockSpec((1, ENCODER_OUTPUT_CHANNELS, m2), lambda i: (i, 0, 0)),
            compiler_params=pltpu.CompilerParams(
                dimension_semantics=("parallel",),
                vmem_limit_bytes=vmem_limit),
        )(cols, self.w1aug, self.w2aug)

        # Drop lane padding + the one garbage column per wq-block, un-interleave the group.
        out = out[:, :, :ho2 * geom["wq"] * blk]
        out = out.reshape(g, ENCODER_OUTPUT_CHANNELS, ho2, geom["wq"], blk)[:, :, :, :wo2, :]
        out = jnp.transpose(out, (0, 4, 1, 2, 3))
        return out.reshape(n, ENCODER_OUTPUT_CHANNELS, ho2, wo2)                 # NCHW


def _reference_forward(x_nchw, model):
    """Pure-JAX f32 reference using lax.conv_general_dilated (NCHW, OIHW)."""
    dn = jax.lax.conv_dimension_numbers(x_nchw.shape, model.w1.shape, ("NCHW", "OIHW", "NCHW"))
    y = jax.lax.conv_general_dilated(x_nchw, model.w1, (2, 2), ((1, 1), (1, 1)),
                                     dimension_numbers=dn)
    y = jnp.maximum(y + model.b1[None, :, None, None], 0.0)
    dn2 = jax.lax.conv_dimension_numbers(y.shape, model.w2.shape, ("NCHW", "OIHW", "NCHW"))
    y = jax.lax.conv_general_dilated(y, model.w2, (2, 2), ((1, 1), (1, 1)),
                                     dimension_numbers=dn2)
    return jax.nn.sigmoid(y + model.b2[None, :, None, None])


if __name__ == "__main__":
    key = jax.random.PRNGKey(0)
    k_param, k_x = jax.random.split(key)
    model = ColorEncoderPallas(k_param)

    x = jax.random.normal(k_x, (2, 3, 16, 16), dtype=jnp.float32)  # NCHW, like PyTorch

    forward = jax.jit(model.__call__)
    y = jax.block_until_ready(forward(x))
    assert y.shape == (2, ENCODER_OUTPUT_CHANNELS, 4, 4), y.shape

    y_ref = jax.block_until_ready(_reference_forward(x, model))
    # bf16 matmul operands (f32 accumulation) -> ~1e-3 level deviations from the f32 reference.
    assert jnp.allclose(y, y_ref, rtol=2e-2, atol=2e-2), float(jnp.max(jnp.abs(y - y_ref)))

    print("KERNEL_OK")
</pallas_src>

<mosaic_0001>
module attributes {stable_mosaic.version = 11 : i64} {
  func.func @_fused_encoder_kernel(%arg0: i32, %arg1: memref<1x28x1024xbf16, #tpu.memory_space<vmem>>, %arg2: memref<16x28xbf16, #tpu.memory_space<vmem>>, %arg3: memref<8x145xbf16, #tpu.memory_space<vmem>>, %arg4: memref<1x8x128xf32, #tpu.memory_space<vmem>>) attributes {dimension_semantics = [#tpu.dimension_semantics<parallel>], iteration_bounds = array<i64: 2>, scalar_prefetch = 0 : i64, scratch_operands = 0 : i64, tpu.core_type = #tpu.core_type<tc>, window_params = [{transform_indices = @transform_0, window_bounds = array<i64: 1, 28, 1024>}, {pipeline_mode = #tpu.pipeline_mode<synchronous>, transform_indices = @transform_1, window_bounds = array<i64: 16, 28>}, {pipeline_mode = #tpu.pipeline_mode<synchronous>, transform_indices = @transform_2, window_bounds = array<i64: 8, 145>}, {transform_indices = @transform_3, window_bounds = array<i64: 1, 8, 128>}]} {
    %c0 = arith.constant 0 : index
    %c0_0 = arith.constant 0 : index
    %0 = vector.load %arg2[%c0, %c0_0] : memref<16x28xbf16, #tpu.memory_space<vmem>>, vector<16x28xbf16>
    %c0_1 = arith.constant 0 : index
    %c0_2 = arith.constant 0 : index
    %1 = vector.load %arg3[%c0_1, %c0_2] : memref<8x145xbf16, #tpu.memory_space<vmem>>, vector<8x145xbf16>
    %c0_3 = arith.constant 0 : index
    %c0_4 = arith.constant 0 : index
    %c0_5 = arith.constant 0 : index
    %2 = vector.load %arg1[%c0_3, %c0_4, %c0_5] : memref<1x28x1024xbf16, #tpu.memory_space<vmem>>, vector<1x28x1024xbf16>
    %3 = vector.shape_cast %2 : vector<1x28x1024xbf16> to vector<28x1024xbf16>
    %cst = arith.constant dense<0.000000e+00> : vector<16x1024xf32>
    %4 = tpu.matmul %0, %3, %cst {dimension_numbers = #tpu.dot_dimension_numbers<[1], [0], [0], [1], [0, 0, 1, 1], [], []>} : vector<16x28xbf16>, vector<28x1024xbf16>, vector<16x1024xf32> -> vector<16x1024xf32>
    %cst_6 = arith.constant 0.000000e+00 : f32
    %5 = vector.broadcast %cst_6 : f32 to vector<16x1024xf32>
    %6 = arith.maximumf %4, %5 : vector<16x1024xf32>
    %7 = arith.truncf %6 : vector<16x1024xf32> to vector<16x1024xbf16>
    %8 = vector.extract_strided_slice %7 {offsets = [0, 0], sizes = [16, 128], strides = [1, 1]} : vector<16x1024xbf16> to vector<16x128xbf16>
    %9 = vector.extract_strided_slice %7 {offsets = [0, 256], sizes = [16, 128], strides = [1, 1]} : vector<16x1024xbf16> to vector<16x128xbf16>
    %10 = vector.extract_strided_slice %7 {offsets = [0, 1], sizes = [16, 128], strides = [1, 1]} : vector<16x1024xbf16> to vector<16x128xbf16>
    %11 = vector.extract_strided_slice %7 {offsets = [0, 512], sizes = [16, 128], strides = [1, 1]} : vector<16x1024xbf16> to vector<16x128xbf16>
    %12 = vector.extract_strided_slice %7 {offsets = [0, 768], sizes = [16, 128], strides = [1, 1]} : vector<16x1024xbf16> to vector<16x128xbf16>
    %13 = vector.extract_strided_slice %7 {offsets = [0, 513], sizes = [16, 128], strides = [1, 1]} : vector<16x1024xbf16> to vector<16x128xbf16>
    %14 = vector.extract_strided_slice %7 {offsets = [0, 5], sizes = [16, 128], strides = [1, 1]} : vector<16x1024xbf16> to vector<16x128xbf16>
    %15 = vector.extract_strided_slice %7 {offsets = [0, 261], sizes = [16, 128], strides = [1, 1]} : vector<16x1024xbf16> to vector<16x128xbf16>
    %16 = vector.extract_strided_slice %7 {offsets = [0, 6], sizes = [16, 128], strides = [1, 1]} : vector<16x1024xbf16> to vector<16x128xbf16>
    %cst_7 = arith.constant 1.000000e+00 : bf16
    %17 = vector.broadcast %cst_7 : bf16 to vector<1x128xbf16>
    %18 = tpu.concatenate %8, %9, %10, %11, %12, %13, %14, %15, %16, %17 in 0 : vector<16x128xbf16>, vector<16x128xbf16>, vector<16x128xbf16>, vector<16x128xbf16>, vector<16x128xbf16>, vector<16x128xbf16>, vector<16x128xbf16>, vector<16x128xbf16>, vector<16x128xbf16>, vector<1x128xbf16> -> vector<145x128xbf16>
    %cst_8 = arith.constant dense<0.000000e+00> : vector<8x128xf32>
    %19 = tpu.matmul %1, %18, %cst_8 {dimension_numbers = #tpu.dot_dimension_numbers<[1], [0], [0], [1], [0, 0, 1, 1], [], []>} : vector<8x145xbf16>, vector<145x128xbf16>, vector<8x128xf32> -> vector<8x128xf32>
    %20 = arith.negf %19 : vector<8x128xf32>
    %21 = math.exp %20 : vector<8x128xf32>
    %cst_9 = arith.constant 1.000000e+00 : f32
    %22 = vector.broadcast %cst_9 : f32 to vector<8x128xf32>
    %23 = arith.addf %22, %21 : vector<8x128xf32>
    %24 = arith.divf %22, %23 : vector<8x128xf32>
    %c0_10 = arith.constant 0 : index
    %c0_11 = arith.constant 0 : index
    %c0_12 = arith.constant 0 : index
    %25 = vector.load %arg4[%c0_10, %c0_11, %c0_12] : memref<1x8x128xf32, #tpu.memory_space<vmem>>, vector<1x8x128xf32>
    %26 = vector.shape_cast %25 : vector<1x8x128xf32> to vector<8x128xf32>
    %27 = vector.shape_cast %24 : vector<8x128xf32> to vector<1x8x128xf32>
    tpu.vector_store %arg4[%c0_10, %c0_11, %c0_12], %27 {strides = array<i32>} : memref<1x8x128xf32, #tpu.memory_space<vmem>>, vector<1x8x128xf32>,
    return
  }
  func.func @transform_0(%arg0: i32) -> (i32, i32, i32) {
    %c0_i32 = arith.constant 0 : i32
    %c0_i32_0 = arith.constant 0 : i32
    %c0_i32_1 = arith.constant 0 : i32
    return %arg0, %c0_i32, %c0_i32_0 : i32, i32, i32
  }
  func.func @transform_1(%arg0: i32) -> (i32, i32) {
    %c0_i32 = arith.constant 0 : i32
    %c0_i32_0 = arith.constant 0 : i32
    %c0_i32_1 = arith.constant 0 : i32
    return %c0_i32, %c0_i32_0 : i32, i32
  }
  func.func @transform_2(%arg0: i32) -> (i32, i32) {
    %c0_i32 = arith.constant 0 : i32
    %c0_i32_0 = arith.constant 0 : i32
    %c0_i32_1 = arith.constant 0 : i32
    return %c0_i32, %c0_i32_0 : i32, i32
  }
  func.func @transform_3(%arg0: i32) -> (i32, i32, i32) {
    %c0_i32 = arith.constant 0 : i32
    %c0_i32_0 = arith.constant 0 : i32
    %c0_i32_1 = arith.constant 0 : i32
    return %arg0, %c0_i32, %c0_i32_0 : i32, i32, i32
  }
}

</mosaic_0001>

<llo_original>
// kernel: a_call__.1
$region0: #{a_call__.1}
  #allocation0 [shape = 'u32[]', space=smem, size = 0x4, offset = 0x4, fixed_abs, tag = 'smem constant byte address 0x4 - core index']
  #allocation1 [shape = 'u32[144,128]{1,0:T(1,128)}', space=vmem, size = 0x12000, scoped, tag = 'internal scratch']
  %s0 = inlined_call_operand.vmem [shape: bf16[2,28,1024], index: 0, kind: input, shape index: {}]
  %s1 = inlined_call_operand.vmem [shape: bf16[16,28], index: 1, kind: input, shape index: {}]
  %s2 = inlined_call_operand.vmem [shape: bf16[8,145], index: 2, kind: input, shape index: {}]
  %s3 = inlined_call_operand.vmem [shape: f32[2,8,128], index: 3, kind: output, shape index: {}]
  %s4 = sld [smem:[#allocation0]]
  $region45: #{a_call__.1} parent=0
    _
  %s6 = ssub.s32 1, %s4
  %s7 = scalar_select 0, %s6, %s4
  loop: start=0, step=1, limit=4
  $region2: #{a_call__.1} parent=0 // loop_pre_header
    _
  $region3: #{a_call__.1} parent=0 // loop_header
    %s9 = sphi 0, %s13
    %p10 = scmp.ge.s32.totalorder %s9, 4
    %s19 = sphi 0, %s21
    %s22 = sphi 0, %s19
    %s23 = sphi 0, %s22
    %s39 = sphi 0, %s23
    %s43 = sphi 0, %s43
    %s45 = sphi 0, %s43
    %s46 = sphi 0, %s45
    %s60 = sphi 0, %s46
    %s64 = sphi 0, %s64
    %s66 = sphi 0, %s64
    %s67 = sphi 0, %s66
    %s81 = sphi 0, %s67
    %s87 = sphi 0, %s89
    %s90 = sphi 0, %s87
    %s91 = sphi 0, %s90
    %s107 = sphi 0, %s91
  $region4: #{a_call__.1} parent=0 // loop_header_branch
    %12 = sbr.rel (%p10) target = $region8
  $region5: #{a_call__.1} parent=0 // loop_body
    %s14 = ssub.s32 %s9, 1
    %s15 = ssub.s32 %s9, 2
    %s16 = sadd.s32 %s9, 1
    %s17 = ssub.s32 %s9, %s16
    %p18 = scmp.eq.s32.totalorder %s17, 0
    %s20 = sadd.s32 %s19, 1
    %s21 = scalar_select %p18, %s19, %s20
    %p24 = pneg %p18
    %p25 = scmp.eq.s32.totalorder %s9, 1
    %p26 = por %p24, %p25
    %p27 = scmp.ne.s32.totalorder %s19, %s22
    %p28 = scmp.eq.s32.totalorder %s9, 0
    %p29 = por %p27, %p28
    %p30 = scmp.ne.s32.totalorder %s19, %s22
    %p31 = scmp.eq.s32.totalorder %s14, 1
    %p32 = por %p30, %p31
    %p33 = scmp.ne.s32.totalorder %s22, %s23
    %p34 = scmp.eq.s32.totalorder %s14, 0
    %p35 = por %p33, %p34
    %p36 = scmp.ne.s32.totalorder %s22, %s23
    %p37 = scmp.eq.s32.totalorder %s15, 1
    %p38 = por %p36, %p37
    %p40 = scmp.ne.s32.totalorder %s23, %s39
    %p41 = scmp.eq.s32.totalorder %s15, 0
    %p42 = por %p40, %p41
    %s44 = sadd.s32 %s43, 1
    %p47 = scmp.eq.s32.totalorder %s9, 1
    %p48 = scmp.ne.s32.totalorder %s43, %s45
    %p49 = scmp.eq.s32.totalorder %s9, 0
    %p50 = por %p48, %p49
    %p51 = scmp.ne.s32.totalorder %s43, %s45
    %p52 = scmp.eq.s32.totalorder %s14, 1
    %p53 = por %p51, %p52
    %p54 = scmp.ne.s32.totalorder %s45, %s46
    %p55 = scmp.eq.s32.totalorder %s14, 0
    %p56 = por %p54, %p55
    %p57 = scmp.ne.s32.totalorder %s45, %s46
    %p58 = scmp.eq.s32.totalorder %s15, 1
    %p59 = por %p57, %p58
    %p61 = scmp.ne.s32.totalorder %s46, %s60
    %p62 = scmp.eq.s32.totalorder %s15, 0
    %p63 = por %p61, %p62
    %s65 = sadd.s32 %s64, 1
    %p68 = scmp.eq.s32.totalorder %s9, 1
    %p69 = scmp.ne.s32.totalorder %s64, %s66
    %p70 = scmp.eq.s32.totalorder %s9, 0
    %p71 = por %p69, %p70
    %p72 = scmp.ne.s32.totalorder %s64, %s66
    %p73 = scmp.eq.s32.totalorder %s14, 1
    %p74 = por %p72, %p73
    %p75 = scmp.ne.s32.totalorder %s66, %s67
    %p76 = scmp.eq.s32.totalorder %s14, 0
    %p77 = por %p75, %p76
    %p78 = scmp.ne.s32.totalorder %s66, %s67
    %p79 = scmp.eq.s32.totalorder %s15, 1
    %p80 = por %p78, %p79
    %p82 = scmp.ne.s32.totalorder %s67, %s81
    %p83 = scmp.eq.s32.totalorder %s15, 0
    %p84 = por %p82, %p83
    %s85 = ssub.s32 %s9, %s16
    %p86 = scmp.eq.s32.totalorder %s85, 0
    %s88 = sadd.s32 %s87, 1
    %s89 = scalar_select %p86, %s87, %s88
    %p92 = pneg %p86
    %p93 = scmp.eq.s32.totalorder %s9, 1
    %p94 = por %p92, %p93
    %p95 = scmp.ne.s32.totalorder %s87, %s90
    %p96 = scmp.eq.s32.totalorder %s9, 0
    %p97 = por %p95, %p96
    %p98 = scmp.ne.s32.totalorder %s87, %s90
    %p99 = scmp.eq.s32.totalorder %s14, 1
    %p100 = por %p98, %p99
    %p101 = scmp.ne.s32.totalorder %s90, %s91
    %p102 = scmp.eq.s32.totalorder %s14, 0
    %p103 = por %p101, %p102
    %p104 = scmp.ne.s32.totalorder %s90, %s91
    %p105 = scmp.eq.s32.totalorder %s15, 1
    %p106 = por %p104, %p105
    %p108 = scmp.ne.s32.totalorder %s91, %s107
    %p109 = scmp.eq.s32.totalorder %s15, 0
    %p110 = por %p108, %p109
    %p111 = scmp.le.s32.totalorder 1, %s9
    %p112 = scmp.lt.s32.totalorder %s9, 3
    %p113 = pnand %p111, %p112
    %p114 = pneg %p113
    // Predicated region
    $region9: #{a_call__.1} parent=5 // pred_check
      _
    $region10: #{a_call__.1} parent=5 // pred_check_branch
      %116 = sbr.rel (%p113) target = $region12
    $region11: #{a_call__.1} parent=5 // pred_region
      %s117 = ssub.s32 %s9, 1
      // Predicated region
      $region13: #{a_call__.1} parent=11 // pred_check
        %p118 = pneg %p56
      $region14: #{a_call__.1} parent=11 // pred_check_branch
        %120 = sbr.rel (%p118) target = $region16
      $region15: #{a_call__.1} parent=11 // pred_region
        _
      $region16: #{a_call__.1} parent=11 // pred_fallthru
        _
      // Predicated region
      $region17: #{a_call__.1} parent=11 // pred_check
        %p121 = pneg %p77
      $region18: #{a_call__.1} parent=11 // pred_check_branch
        %123 = sbr.rel (%p121) target = $region20
      $region19: #{a_call__.1} parent=11 // pred_region
        _
      $region20: #{a_call__.1} parent=11 // pred_fallthru
        _
    $region12: #{a_call__.1} parent=5 // pred_fallthru
      _
    %p124 = scmp.lt.s32.totalorder %s9, 2
    // Predicated region
    $region21: #{a_call__.1} parent=5 // pred_check
      %p125 = pneg %p124
    $region22: #{a_call__.1} parent=5 // pred_check_branch
      %127 = sbr.rel (%p125) target = $region24
    $region23: #{a_call__.1} parent=5 // pred_region
      // Predicated region
      $region25: #{a_call__.1} parent=23 // pred_check
        %p128 = pneg %p29
      $region26: #{a_call__.1} parent=23 // pred_check_branch
        %130 = sbr.rel (%p128) target = $region28
      $region27: #{a_call__.1} parent=23 // pred_region
        %p131 = scmp.lt.s32.totalorder %s9, 1
        %s132 = scalar_select %p131, %s9, 1
        %s133 = smul.addr %s132, 32
        %s134 = smul.addr %s133, 4
        %s135 = scalar_lea.vmem %s0, %s134
      $region28: #{a_call__.1} parent=23 // pred_fallthru
        _
    $region24: #{a_call__.1} parent=5 // pred_fallthru
      _
    %p136 = scmp.le.s32.totalorder 1, %s9
    %p137 = scmp.lt.s32.totalorder %s9, 3
    %p138 = pnand %p136, %p137
    %p139 = pneg %p138
    // Predicated region
    $region29: #{a_call__.1} parent=5 // pred_check
      _
    $region30: #{a_call__.1} parent=5 // pred_check_branch
      %141 = sbr.rel (%p138) target = $region32
    $region31: #{a_call__.1} parent=5 // pred_region
      %s142 = ssub.s32 %s9, 1
      %p143 = scmp.lt.s32.totalorder %s14, 1
      %s144 = scalar_select %p143, %s14, 1
      %s145 = smul.addr %s144, 32
      %s146 = smul.addr %s145, 4
      %s147 = scalar_lea.vmem %s0, %s146
      %p148 = pneg %p35
      %p149 = pneg %p32
      %p150 = pneg %p56
      %p151 = pneg %p53
      %p152 = pneg %p77
      %p153 = pneg %p74
      %p154 = pneg %p103
      %p155 = pneg %p100
      %p156 = scmp.lt.s32.totalorder %s14, 1
      %s157 = scalar_select %p156, %s14, 1
      %s158 = smul.addr %s157, 8
      %s159 = scalar_lea.vmem %s3, %s158
      %p160 = scmp.lt.s32.totalorder %s14, 1
      %s161 = scalar_select %p160, %s14, 1
      %s162 = smul.addr %s161, 32
      %s163 = smul.addr %s162, 4
      %s164 = scalar_lea.vmem %s0, %s163
      %p165 = scmp.lt.s32.totalorder %s14, 1
      %s166 = scalar_select %p165, %s14, 1
      %s167 = smul.addr %s166, 8
      %s168 = scalar_lea.vmem %s3, %s167
      %v171 = vld [vmem:[%s1] sm:$0xf]
      %v172 = vld [vmem:[%s1 + $0x4] sm:$0xf]
      %v173 = vld [vmem:[%s2] sm:$0xff]
      %v174 = vld [vmem:[%s164] sm:$0xff]
      %v175 = vld [vmem:[%s164 + $0x8] sm:$0xff]
      %v176 = vld [vmem:[%s164 + $0x10] sm:$0xff]
      %v177 = vld [vmem:[%s164 + $0x18] sm:$0xff]
      %v178 = vld [vmem:[%s164 + $0x20] sm:$0xff]
      %v179 = vld [vmem:[%s164 + $0x28] sm:$0xff]
      %v180 = vld [vmem:[%s164 + $0x30] sm:$0xff]
      %v181 = vld [vmem:[%s164 + $0x38] sm:$0xff]
      %v182 = vld [vmem:[%s164 + $0x40] sm:$0xff]
      %v183 = vld [vmem:[%s164 + $0x48] sm:$0xff]
      %v184 = vld [vmem:[%s164 + $0x50] sm:$0xff]
      %v185 = vld [vmem:[%s164 + $0x58] sm:$0xff]
      %v186 = vld [vmem:[%s164 + $0x60] sm:$0x33]
      %v187 = vld [vmem:[%s164 + $0x68] sm:$0x33]
      %v188 = vld [vmem:[%s164 + $0x70] sm:$0x33]
      %v189 = vld [vmem:[%s164 + $0x78] sm:$0x33]
      %v192 = vunpack.c.l.b16 %v171
      %v193 = vunpack.c.l.b16 %v172
      %v194 = vpack.c.b16 %v193, %v192
      %v211 = vunpack.c.l.b16 %v174
      %v212 = vunpack.c.h.b16 %v174
      %v213 = vunpack.c.l.b16 %v175
      %v214 = vunpack.c.h.b16 %v175
      %v215 = vunpack.c.l.b16 %v176
      %v216 = vunpack.c.h.b16 %v176
      %v217 = vunpack.c.l.b16 %v177
      %v218 = vunpack.c.h.b16 %v177
      %v219 = vunpack.c.l.b16 %v178
      %v220 = vunpack.c.h.b16 %v178
      %v221 = vunpack.c.l.b16 %v179
      %v222 = vunpack.c.h.b16 %v179
      %v223 = vunpack.c.l.b16 %v180
      %v224 = vunpack.c.h.b16 %v180
      %v225 = vunpack.c.l.b16 %v181
      %v226 = vunpack.c.h.b16 %v181
      %v227 = vunpack.c.l.b16 %v182
      %v228 = vunpack.c.h.b16 %v182
      %v229 = vunpack.c.l.b16 %v183
      %v230 = vunpack.c.h.b16 %v183
      %v231 = vunpack.c.l.b16 %v184
      %v232 = vunpack.c.h.b16 %v184
      %v233 = vunpack.c.l.b16 %v185
      %v234 = vunpack.c.h.b16 %v185
      %v235 = vunpack.c.l.b16 %v186
      %v236 = vunpack.c.h.b16 %v186
      %v237 = vunpack.c.l.b16 %v187
      %v238 = vunpack.c.h.b16 %v187
      %v239 = vunpack.c.l.b16 %v188
      %v240 = vunpack.c.h.b16 %v188
      %v241 = vunpack.c.l.b16 %v189
      %v242 = vunpack.c.h.b16 %v189
      %v243 = vpack.c.b16 %v219, %v211
      %v244 = vpack.c.b16 %v220, %v212
      %v245 = vpack.c.b16 %v221, %v213
      %v246 = vpack.c.b16 %v222, %v214
      %v247 = vpack.c.b16 %v223, %v215
      %v248 = vpack.c.b16 %v224, %v216
      %v249 = vpack.c.b16 %v225, %v217
      %v250 = vpack.c.b16 %v226, %v218
      %v251 = vpack.c.b16 %v235, %v227
      %v252 = vpack.c.b16 %v236, %v228
      %v253 = vpack.c.b16 %v237, %v229
      %v254 = vpack.c.b16 %v238, %v230
      %v255 = vpack.c.b16 %v239, %v231
      %v256 = vpack.c.b16 %v240, %v232
      %v257 = vpack.c.b16 %v241, %v233
      %v258 = vpack.c.b16 %v242, %v234
      %vm267 = vcmask 228352
      %v269 = vsel %vm267, %v194, 0
      %vm271 = vcmask 1045504
      %v273 = vsel %vm271, %v251, 0
      %v276 = vsel %vm271, %v252, 0
      %v279 = vsel %vm271, %v253, 0
      %v282 = vsel %vm271, %v254, 0
      %v285 = vsel %vm271, %v255, 0
      %v288 = vsel %vm271, %v256, 0
      %v291 = vsel %vm271, %v257, 0
      %v294 = vsel %vm271, %v258, 0
      %296 = vmatprep.subr.bf16.mxu0 0
      %297 = vmatpush1.bf16.msra.mxu0 0
      %298 = vmatprep.subr.bf16.mxu0 0
      %299 = vmatpush1.bf16.msra.mxu0 0
      %300 = vmatprep.subr.bf16.mxu0 0
      %301 = vmatpush1.bf16.msra.mxu0 0
      %302 = vmatprep.subr.bf16.mxu0 0
      %303 = vmatpush1.bf16.msra.mxu0 0
      %304 = vmatprep.subr.bf16.mxu0 0
      %305 = vmatpush1.bf16.msra.mxu0 0
      %306 = vmatprep.subr.bf16.mxu0 0
      %307 = vmatpush1.bf16.msra.mxu0 0
      %308 = vmatprep.subr.bf16.mxu0 %v276
      %309 = vmatpush1.bf16.msra.mxu0 %v273
      %310 = vmatprep.subr.bf16.mxu0 %v244
      %311 = vmatpush1.bf16.msra.mxu0 %v243
      %312 = vmatprep.subr.bf16.mxu0 0
      %313 = vmatpush2.bf16.msra.mxu0 0
      %314 = vmatprep.subr.bf16.mxu0 0
      %315 = vmatpush2.bf16.msra.mxu0 0
      %316 = vmatprep.subr.bf16.mxu0 0
      %317 = vmatpush2.bf16.msra.mxu0 0
      %318 = vmatprep.subr.bf16.mxu0 0
      %319 = vmatpush2.bf16.msra.mxu0 0
      %320 = vmatprep.subr.bf16.mxu0 0
      %321 = vmatpush2.bf16.msra.mxu0 0
      %322 = vmatprep.subr.bf16.mxu0 0
      %323 = vmatpush2.bf16.msra.mxu0 0
      %324 = vmatprep.subr.bf16.mxu0 0
      %325 = vmatpush2.bf16.msra.mxu0 0
      %326 = vmatprep.subr.bf16.mxu0 0
      %327 = vmatpush2.bf16.msra.mxu0 0
      %328 = vmatprep.mubr.bf16.mxu0 0
      %329 = vmatmul.mubr.bf16.gmra.mxu0 %v269
      %v330 = vpop.f32.mrf.mxu0
      %v331 = vadd.f32 0.0, %v330
      %v332 = vpop.f32.mrf.mxu0
      %v333 = vadd.f32 0.0, %v332
      %v334 = vpop.f32.mrf.mxu0
      %v335 = vadd.f32 0.0, %v334
      %v336 = vpop.f32.mrf.mxu0
      %v337 = vadd.f32 0.0, %v336
      %338 = vdwg.mxu0
      %339 = vmatprep.subr.bf16.mxu0 0
      %340 = vmatpush1.bf16.msra.mxu0 0
      %341 = vmatprep.subr.bf16.mxu0 0
      %342 = vmatpush1.bf16.msra.mxu0 0
      %343 = vmatprep.subr.bf16.mxu0 0
      %344 = vmatpush1.bf16.msra.mxu0 0
      %345 = vmatprep.subr.bf16.mxu0 0
      %346 = vmatpush1.bf16.msra.mxu0 0
      %347 = vmatprep.subr.bf16.mxu0 0
      %348 = vmatpush1.bf16.msra.mxu0 0
      %349 = vmatprep.subr.bf16.mxu0 0
      %350 = vmatpush1.bf16.msra.mxu0 0
      %351 = vmatprep.subr.bf16.mxu0 %v282
      %352 = vmatpush1.bf16.msra.mxu0 %v279
      %353 = vmatprep.subr.bf16.mxu0 %v246
      %354 = vmatpush1.bf16.msra.mxu0 %v245
      %355 = vmatprep.subr.bf16.mxu0 0
      %356 = vmatpush2.bf16.msra.mxu0 0
      %357 = vmatprep.subr.bf16.mxu0 0
      %358 = vmatpush2.bf16.msra.mxu0 0
      %359 = vmatprep.subr.bf16.mxu0 0
      %360 = vmatpush2.bf16.msra.mxu0 0
      %361 = vmatprep.subr.bf16.mxu0 0
      %362 = vmatpush2.bf16.msra.mxu0 0
      %363 = vmatprep.subr.bf16.mxu0 0
      %364 = vmatpush2.bf16.msra.mxu0 0
      %365 = vmatprep.subr.bf16.mxu0 0
      %366 = vmatpush2.bf16.msra.mxu0 0
      %367 = vmatprep.subr.bf16.mxu0 0
      %368 = vmatpush2.bf16.msra.mxu0 0
      %369 = vmatprep.subr.bf16.mxu0 0
      %370 = vmatpush2.bf16.msra.mxu0 0
      %371 = vmatprep.mubr.bf16.mxu0 0
      %372 = vmatmul.mubr.bf16.gmra.mxu0 %v269
      %v373 = vpop.f32.mrf.mxu0
      %v374 = vadd.f32 0.0, %v373
      %v375 = vpop.f32.mrf.mxu0
      %v376 = vadd.f32 0.0, %v375
      %v377 = vpop.f32.mrf.mxu0
      %v378 = vadd.f32 0.0, %v377
      %v379 = vpop.f32.mrf.mxu0
      %v380 = vadd.f32 0.0, %v379
      %381 = vdwg.mxu0
      %382 = vmatprep.subr.bf16.mxu0 0
      %383 = vmatpush1.bf16.msra.mxu0 0
      %384 = vmatprep.subr.bf16.mxu0 0
      %385 = vmatpush1.bf16.msra.mxu0 0
      %386 = vmatprep.subr.bf16.mxu0 0
      %387 = vmatpush1.bf16.msra.mxu0 0
      %388 = vmatprep.subr.bf16.mxu0 0
      %389 = vmatpush1.bf16.msra.mxu0 0
      %390 = vmatprep.subr.bf16.mxu0 0
      %391 = vmatpush1.bf16.msra.mxu0 0
      %392 = vmatprep.subr.bf16.mxu0 0
      %393 = vmatpush1.bf16.msra.mxu0 0
      %394 = vmatprep.subr.bf16.mxu0 %v288
      %395 = vmatpush1.bf16.msra.mxu0 %v285
      %396 = vmatprep.subr.bf16.mxu0 %v248
      %397 = vmatpush1.bf16.msra.mxu0 %v247
      %398 = vmatprep.subr.bf16.mxu0 0
      %399 = vmatpush2.bf16.msra.mxu0 0
      %400 = vmatprep.subr.bf16.mxu0 0
      %401 = vmatpush2.bf16.msra.mxu0 0
      %402 = vmatprep.subr.bf16.mxu0 0
      %403 = vmatpush2.bf16.msra.mxu0 0
      %404 = vmatprep.subr.bf16.mxu0 0
      %405 = vmatpush2.bf16.msra.mxu0 0
      %406 = vmatprep.subr.bf16.mxu0 0
      %407 = vmatpush2.bf16.msra.mxu0 0
      %408 = vmatprep.subr.bf16.mxu0 0
      %409 = vmatpush2.bf16.msra.mxu0 0
      %410 = vmatprep.subr.bf16.mxu0 0
      %411 = vmatpush2.bf16.msra.mxu0 0
      %412 = vmatprep.subr.bf16.mxu0 0
      %413 = vmatpush2.bf16.msra.mxu0 0
      %414 = vmatprep.mubr.bf16.mxu0 0
      %415 = vmatmul.mubr.bf16.gmra.mxu0 %v269
      %v416 = vpop.f32.mrf.mxu0
      %v417 = vadd.f32 0.0, %v416
      %v418 = vpop.f32.mrf.mxu0
      %v419 = vadd.f32 0.0, %v418
      %v420 = vpop.f32.mrf.mxu0
      %v421 = vadd.f32 0.0, %v420
      %v422 = vpop.f32.mrf.mxu0
      %v423 = vadd.f32 0.0, %v422
      %424 = vdwg.mxu0
      %425 = vmatprep.subr.bf16.mxu0 0
      %426 = vmatpush1.bf16.msra.mxu0 0
      %427 = vmatprep.subr.bf16.mxu0 0
      %428 = vmatpush1.bf16.msra.mxu0 0
      %429 = vmatprep.subr.bf16.mxu0 0
      %430 = vmatpush1.bf16.msra.mxu0 0
      %431 = vmatprep.subr.bf16.mxu0 0
      %432 = vmatpush1.bf16.msra.mxu0 0
      %433 = vmatprep.subr.bf16.mxu0 0
      %434 = vmatpush1.bf16.msra.mxu0 0
      %435 = vmatprep.subr.bf16.mxu0 0
      %436 = vmatpush1.bf16.msra.mxu0 0
      %437 = vmatprep.subr.bf16.mxu0 %v294
      %438 = vmatpush1.bf16.msra.mxu0 %v291
      %439 = vmatprep.subr.bf16.mxu0 %v250
      %440 = vmatpush1.bf16.msra.mxu0 %v249
      %441 = vmatprep.subr.bf16.mxu0 0
      %442 = vmatpush2.bf16.msra.mxu0 0
      %443 = vmatprep.subr.bf16.mxu0 0
      %444 = vmatpush2.bf16.msra.mxu0 0
      %445 = vmatprep.subr.bf16.mxu0 0
      %446 = vmatpush2.bf16.msra.mxu0 0
      %447 = vmatprep.subr.bf16.mxu0 0
      %448 = vmatpush2.bf16.msra.mxu0 0
      %449 = vmatprep.subr.bf16.mxu0 0
      %450 = vmatpush2.bf16.msra.mxu0 0
      %451 = vmatprep.subr.bf16.mxu0 0
      %452 = vmatpush2.bf16.msra.mxu0 0
      %453 = vmatprep.subr.bf16.mxu0 0
      %454 = vmatpush2.bf16.msra.mxu0 0
      %455 = vmatprep.subr.bf16.mxu0 0
      %456 = vmatpush2.bf16.msra.mxu0 0
      %457 = vmatprep.mubr.bf16.mxu0 0
      %458 = vmatmul.mubr.bf16.gmra.mxu0 %v269
      %v459 = vpop.f32.mrf.mxu0
      %v460 = vadd.f32 0.0, %v459
      %v461 = vpop.f32.mrf.mxu0
      %v462 = vpop.f32.mrf.mxu0
      %v463 = vadd.f32 0.0, %v462
      %v464 = vpop.f32.mrf.mxu0
      %465 = vdwg.mxu0
      %v466 = vmax.f32 %v331, 0.0
      %v467 = vmax.f32 %v333, 0.0
      %v468 = vmax.f32 %v374, 0.0
      %v469 = vmax.f32 %v376, 0.0
      %v470 = vmax.f32 %v417, 0.0
      %v471 = vmax.f32 %v419, 0.0
      %v472 = vmax.f32 %v460, 0.0
      %v473 = vmax.f32 %v335, 0.0
      %v474 = vmax.f32 %v337, 0.0
      %v475 = vmax.f32 %v378, 0.0
      %v476 = vmax.f32 %v380, 0.0
      %v477 = vmax.f32 %v421, 0.0
      %v478 = vmax.f32 %v423, 0.0
      %v479 = vmax.f32 %v463, 0.0
      %v480 = vpack.c.bf16 %v473, %v466
      %v481 = vpack.c.bf16 %v474, %v467
      %v482 = vpack.c.bf16 %v475, %v468
      %v483 = vpack.c.bf16 %v476, %v469
      %v484 = vpack.c.bf16 %v477, %v470
      %v485 = vpack.c.bf16 %v478, %v471
      %v486 = vpack.c.bf16 %v479, %v472
      %489 = vrot.lane.b32.xlu0 %v480, 127
      %v490 = vpop.permute.xlu0 %489
      %491 = vrot.lane.b32.xlu0 %v481, 127
      %v492 = vpop.permute.xlu0 %491
      %vm493 = vcmask 1039360
      %v494 = vsel %vm493, %v490, %v492
      %498 = vrot.lane.b32.xlu0 %v484, 127
      %v499 = vpop.permute.xlu0 %498
      %500 = vrot.lane.b32.xlu0 %v485, 127
      %v501 = vpop.permute.xlu0 %500
      %v502 = vsel %vm493, %v499, %v501
      %504 = vrot.lane.b32.xlu0 %v480, 123
      %v505 = vpop.permute.xlu0 %504
      %506 = vrot.lane.b32.xlu0 %v481, 123
      %v507 = vpop.permute.xlu0 %506
      %vm508 = vcmask 1006592
      %v509 = vsel %vm508, %v505, %v507
      %513 = vrot.lane.b32.xlu0 %v482, 123
      %v514 = vpop.permute.xlu0 %513
      %515 = vrot.lane.b32.xlu0 %v483, 123
      %v516 = vpop.permute.xlu0 %515
      %v517 = vsel %vm508, %v514, %v516
      %519 = vrot.lane.b32.xlu0 %v480, 122
      %v520 = vpop.permute.xlu0 %519
      %521 = vrot.lane.b32.xlu0 %v481, 122
      %v522 = vpop.permute.xlu0 %521
      %vm523 = vcmask 998400
      %v524 = vsel %vm523, %v520, %v522
      %v527 = vunpack.c.l.b16 %v173
      %v528 = vunpack.c.h.b16 %v173
      %v529 = vpack.c.b16 %v527, %v527
      %v530 = vpack.c.b16 %v528, %v528
      %vm532 = vcmask 138240
      %v534 = vsel %vm532, %v530, 0
      %vm536 = vcmask 1040384
      %v537 = vsel 0, 4294967295, 65535
      %v538 = vsel %vm536, %v537, 0
      %v540 = vand.u32 1065369472, %v538
      %542 = vmatprep.subr.bf16.mxu0 0
      %543 = vmatpush1.bf16.msra.mxu0 %v517
      %544 = vmatprep.subr.bf16.mxu0 0
      %545 = vmatpush1.bf16.msra.mxu0 %v509
      %546 = vmatprep.subr.bf16.mxu0 0
      %547 = vmatpush1.bf16.msra.mxu0 %v502
      %548 = vmatprep.subr.bf16.mxu0 0
      %549 = vmatpush1.bf16.msra.mxu0 %v486
      %550 = vmatprep.subr.bf16.mxu0 0
      %551 = vmatpush1.bf16.msra.mxu0 %v484
      %552 = vmatprep.subr.bf16.mxu0 0
      %553 = vmatpush1.bf16.msra.mxu0 %v494
      %554 = vmatprep.subr.bf16.mxu0 0
      %555 = vmatpush1.bf16.msra.mxu0 %v482
      %556 = vmatprep.subr.bf16.mxu0 0
      %557 = vmatpush1.bf16.msra.mxu0 %v480
      %558 = vmatprep.subr.bf16.mxu0 0
      %559 = vmatpush2.bf16.msra.mxu0 0
      %560 = vmatprep.subr.bf16.mxu0 0
      %561 = vmatpush2.bf16.msra.mxu0 0
      %562 = vmatprep.subr.bf16.mxu0 0
      %563 = vmatpush2.bf16.msra.mxu0 0
      %564 = vmatprep.subr.bf16.mxu0 0
      %565 = vmatpush2.bf16.msra.mxu0 0
      %566 = vmatprep.subr.bf16.mxu0 0
      %567 = vmatpush2.bf16.msra.mxu0 0
      %568 = vmatprep.subr.bf16.mxu0 0
      %569 = vmatpush2.bf16.msra.mxu0 0
      %570 = vmatprep.subr.bf16.mxu0 0
      %571 = vmatpush2.bf16.msra.mxu0 %v540
      %572 = vmatprep.subr.bf16.mxu0 0
      %573 = vmatpush2.bf16.msra.mxu0 %v524
      %574 = vmatprep.mubr.bf16.mxu0 %v534
      %575 = vmatmul.mubr.bf16.gmra.mxu0 %v529
      %v576 = vpop.f32.mrf.mxu0
      %v577 = vadd.f32 0.0, %v576
      %v578 = vpop.f32.mrf.mxu0
      %v579 = vpop.f32.mrf.mxu0
      %v580 = vpop.f32.mrf.mxu0
      %581 = vdwg.mxu0
      %v582 = vxor.u32 %v577, 2147483648
      %v583 = vmul.f32 %v582, 1.442695
      %v584 = vpow.pop %v583
      %v585 = vadd.f32 %v584, 1.0
      %v586 = vrcp.pop %v585
      %v587 = vmul.f32 1.0, %v586
      %588 = vst [vmem:[%s168] sm:$0xff] %v587
      %p589 = scmp.lt.s32.totalorder %s14, 1
      %s590 = scalar_select %p589, %s14, 1
      %s591 = smul.addr %s590, 8
      %s592 = scalar_lea.vmem %s3, %s591
      // Predicated region
      $region33: #{a_call__.1} parent=31 // pred_check
        %p593 = pneg %p100
      $region34: #{a_call__.1} parent=31 // pred_check_branch
        %595 = sbr.rel (%p593) target = $region36
      $region35: #{a_call__.1} parent=31 // pred_region
        _
      $region36: #{a_call__.1} parent=31 // pred_fallthru
        _
    $region32: #{a_call__.1} parent=5 // pred_fallthru
      _
    %p596 = scmp.le.s32.totalorder 2, %s9
    // Predicated region
    $region37: #{a_call__.1} parent=5 // pred_check
      %p597 = pneg %p596
    $region38: #{a_call__.1} parent=5 // pred_check_branch
      %599 = sbr.rel (%p597) target = $region40
    $region39: #{a_call__.1} parent=5 // pred_region
      %s600 = ssub.s32 %s9, 2
      // Predicated region
      $region41: #{a_call__.1} parent=39 // pred_check
        %p601 = pneg %p106
      $region42: #{a_call__.1} parent=39 // pred_check_branch
        %603 = sbr.rel (%p601) target = $region44
      $region43: #{a_call__.1} parent=39 // pred_region
        %p604 = scmp.lt.s32.totalorder %s15, 1
        %s605 = scalar_select %p604, %s15, 1
        %s606 = smul.addr %s605, 8
        %s607 = scalar_lea.vmem %s3, %s606
      $region44: #{a_call__.1} parent=39 // pred_fallthru
        _
    $region40: #{a_call__.1} parent=5 // pred_fallthru
      _
  $region6: #{a_call__.1} parent=0 // loop_footer
    %s13 = sadd.s32 1, %s9
  $region7: #{a_call__.1} parent=0 // loop_footer_branch
    %8 = sbr.rel target = $region3
  $region8: #{a_call__.1} parent=0 // loop_exit
    _

</llo_original>
